<compile_context>
chip_gen: v6e
topology: v6e:2x2x1
jax: 0.10.0
libtpu: 0.0.40
codegen_flags: <defaults>
</compile_context>

<pallas_src>
import math

import jax
import jax.numpy as jnp
from jax.experimental import pallas as pl
from jax.experimental.pallas import tpu as pltpu


def _focal_ce_kernel(x_ref, t_ref, o_ref):
    """Per-(image, tile) cross-entropy partial sum.

    x_ref: (C, TS, L) logits (native dtype)
    t_ref: (C, TS, L) per-class target map (native dtype)
    o_ref: (1, 1, 1, 1) f32 partial sum of per-pixel CE over this tile
    """
    num_classes = x_ref.shape[0]

    # Single streaming pass over the class axis: online logsumexp fused with
    # the target argmax "gather".  Strict '>' preserves first-occurrence
    # tie-break (matches torch / jnp argmax).  Everything lives in lane-dense
    # (TS, L) vregs; no (C, TS, L) temporaries are materialized.
    x0 = x_ref[0].astype(jnp.float32)        # (TS, L)
    m = x0                                   # running max of logits
    s = jnp.ones_like(x0)                    # sum exp(logit - m); class 0 -> exp(0) = 1
    best_t = t_ref[0]                        # running best target value (native dtype)
    sel = x0                                 # logit at the target argmax

    for cls in range(1, num_classes):
        xc = x_ref[cls].astype(jnp.float32)
        tc = t_ref[cls]
        # Online logsumexp (EUP exp, VPU max/mul/add).
        m_new = jnp.maximum(m, xc)
        s = s * jnp.exp(m - m_new) + jnp.exp(xc - m_new)
        m = m_new
        # Target argmax / logit select, native-dtype compare.
        take = tc > best_t
        best_t = jnp.where(take, tc, best_t)
        sel = jnp.where(take, xc, sel)

    ce = (m + jnp.log(s)) - sel              # per-pixel cross-entropy (TS, L)
    # One small cross-lane/sublane reduce per grid step, hidden under the DMA.
    o_ref[...] = jnp.sum(ce, keepdims=True).reshape(1, 1, 1, 1)


def _plan_tiles(c, h, w, in_dtype, tgt_dtype, target_bytes=2 << 20):
    """Pick (lane, m, ts): reshape H*W -> (m, lane) and tile m by ts."""
    total = h * w

    # Lane dim: largest multiple of 128 dividing H*W (capped at 2048).  NCHW is
    # contiguous over H*W per (n, c), so the reshape is metadata-only.
    lane = 0
    cand = 128
    while cand <= min(total, 2048):
        if total % cand == 0:
            lane = cand
        cand += 128
    if lane == 0:                 # H*W has no multiple-of-128 divisor: keep (H, W)
        lane = w
    m = total // lane

    # Sublane tile: multiple of both dtypes' packing factors (f32->8, bf16->16,
    # int8->32) unless equal to the full dim, and block bytes <= target_bytes.
    pack_in = max(1, 32 // jnp.dtype(in_dtype).itemsize)
    pack_tg = max(1, 32 // jnp.dtype(tgt_dtype).itemsize)
    step = math.lcm(pack_in, pack_tg)
    cands = [d for d in range(step, m + 1, step) if m % d == 0]
    if m not in cands:
        cands.append(m)
    blk_item = max(jnp.dtype(in_dtype).itemsize, jnp.dtype(tgt_dtype).itemsize)
    fitting = [d for d in cands if c * d * lane * blk_item <= target_bytes]
    ts = max(fitting) if fitting else min(cands)
    return lane, m, ts


def focal_loss_2d(inputs, target, *, gamma=2, classes=1):
    """Pallas implementation of FocalLoss2d.forward (classes=1 path, NCHW)."""
    if classes == 2:
        # TODO(synk): classes==2 path (integer-class target) not implemented;
        # the default module config (classes=1) uses target.argmax over C.
        raise NotImplementedError("classes=2 path not implemented")

    assert inputs.ndim == 4 and target.ndim == 4, "expected NCHW inputs/target"
    n, c, h, w = inputs.shape
    assert target.shape == (n, c, h, w)

    lane, m, ts = _plan_tiles(c, h, w, inputs.dtype, target.dtype)
    tiles = m // ts

    # Metadata-only reshape (no transpose, no extra HBM pass).
    x4 = inputs.reshape(n, c, m, lane)
    t4 = target.reshape(n, c, m, lane)

    # Explicit VMEM budget from the actual block math (2 pipeline buffers per
    # input + f32 working set) so v7x's 64 MiB VMEM never silently spills.
    in_blk = c * ts * lane * jnp.dtype(inputs.dtype).itemsize
    tg_blk = c * ts * lane * jnp.dtype(target.dtype).itemsize
    work = 10 * ts * lane * 4
    need = 2 * (in_blk + tg_blk) + work + (2 << 20)
    vmem_limit = int(min(max(2 * need, 32 << 20), 48 << 20))

    partials = pl.pallas_call(
        _focal_ce_kernel,
        out_shape=jax.ShapeDtypeStruct((n, tiles, 1, 1), jnp.float32),
        grid_spec=pltpu.PrefetchScalarGridSpec(
            num_scalar_prefetch=0,
            grid=(n, tiles),
            in_specs=[
                pl.BlockSpec((None, c, ts, lane), lambda i, j: (i, 0, j, 0)),
                pl.BlockSpec((None, c, ts, lane), lambda i, j: (i, 0, j, 0)),
            ],
            out_specs=pl.BlockSpec((1, 1, 1, 1), lambda i, j: (i, j, 0, 0)),
        ),
        compiler_params=pltpu.CompilerParams(
            dimension_semantics=("parallel", "parallel"),
            vmem_limit_bytes=vmem_limit),
    )(x4, t4)

    # Tiny scalar epilogue (runs once): mean over all N*H*W pixels + focal
    # transform.  Integer gamma uses a multiply chain instead of pow.
    mean_ce = jnp.sum(partials) / jnp.float32(n * h * w)
    logpt = -mean_ce
    pt = jnp.exp(logpt)
    g = float(gamma)
    if g.is_integer() and 0 <= int(g) <= 8:
        one_minus_pt = 1.0 - pt
        focal_w = jnp.float32(1.0)
        for _ in range(int(g)):
            focal_w = focal_w * one_minus_pt
    else:
        focal_w = (1.0 - pt) ** jnp.float32(gamma)
    return -focal_w * logpt


def _reference(inputs, target, gamma=2):
    n, c, h, w = inputs.shape
    x = jnp.transpose(inputs, (0, 2, 3, 1)).reshape(-1, c).astype(jnp.float32)
    t = jnp.transpose(target, (0, 2, 3, 1)).reshape(-1, c).astype(jnp.float32)
    labels = jnp.argmax(t, axis=1)
    lse = jax.scipy.special.logsumexp(x, axis=1)
    sel = jnp.take_along_axis(x, labels[:, None], axis=1)[:, 0]
    mean_ce = jnp.mean(lse - sel)
    logpt = -mean_ce
    pt = jnp.exp(logpt)
    return -((1.0 - pt) ** gamma) * logpt


def _make_case(key, n, c, h, w, in_dtype):
    k_in, k_lbl = jax.random.split(key)
    inputs = jax.random.normal(k_in, (n, c, h, w), dtype=jnp.float32).astype(in_dtype)
    labels = jax.random.randint(k_lbl, (n, h, w), 0, c)
    # one-hot target in NCHW, as FocalLoss2d(classes=1) expects a per-class map
    target = jnp.transpose(jax.nn.one_hot(labels, c, dtype=jnp.float32), (0, 3, 1, 2))
    return inputs, target


if __name__ == "__main__":
    key = jax.random.PRNGKey(0)
    keys = jax.random.split(key, 3)

    cases = [
        ((2, 4, 16, 16), jnp.float32),    # lane-dense path: H*W = 256 -> L=256
        ((1, 3, 5, 7), jnp.float32),      # fallback path: H*W not /128, full-dim blocks
        ((2, 4, 16, 16), jnp.bfloat16),   # bf16 logits, native-dtype target compare
    ]
    for kk, (shape, dt) in zip(keys, cases):
        inputs, target = _make_case(kk, *shape, dt)
        loss = focal_loss_2d(inputs, target, gamma=2, classes=1)
        loss = jax.block_until_ready(loss)
        ref = _reference(inputs, target, gamma=2)
        assert jnp.allclose(loss, ref, rtol=1e-4, atol=1e-6), (shape, dt, loss, ref)

    print("KERNEL_OK")
</pallas_src>

<mosaic_0001>
module attributes {stable_mosaic.version = 11 : i64} {
  func.func @_focal_ce_kernel(%arg0: i32, %arg1: i32, %arg2: memref<1x4x1x256xf32, #tpu.memory_space<vmem>>, %arg3: memref<1x4x1x256xf32, #tpu.memory_space<vmem>>, %arg4: memref<1x1x1x1xf32, #tpu.memory_space<vmem>>) attributes {dimension_semantics = [#tpu.dimension_semantics<parallel>, #tpu.dimension_semantics<parallel>], iteration_bounds = array<i64: 2, 1>, scalar_prefetch = 0 : i64, scratch_operands = 0 : i64, tpu.core_type = #tpu.core_type<tc>, window_params = [{transform_indices = @transform_0, window_bounds = array<i64: 1, 4, 1, 256>}, {transform_indices = @transform_1, window_bounds = array<i64: 1, 4, 1, 256>}, {transform_indices = @transform_2, window_bounds = array<i64: 1, 1, 1, 1>}]} {
    %c0 = arith.constant 0 : index
    %c0_0 = arith.constant 0 : index
    %c0_1 = arith.constant 0 : index
    %c0_2 = arith.constant 0 : index
    %0 = vector.load %arg2[%c0, %c0_0, %c0_1, %c0_2] : memref<1x4x1x256xf32, #tpu.memory_space<vmem>>, vector<1x1x1x256xf32>
    %1 = vector.shape_cast %0 : vector<1x1x1x256xf32> to vector<1x256xf32>
    %cst = arith.constant 1.000000e+00 : f32
    %2 = vector.broadcast %cst : f32 to vector<1x256xf32>
    %c0_3 = arith.constant 0 : index
    %c0_4 = arith.constant 0 : index
    %c0_5 = arith.constant 0 : index
    %c0_6 = arith.constant 0 : index
    %3 = vector.load %arg3[%c0_3, %c0_4, %c0_5, %c0_6] : memref<1x4x1x256xf32, #tpu.memory_space<vmem>>, vector<1x1x1x256xf32>
    %4 = vector.shape_cast %3 : vector<1x1x1x256xf32> to vector<1x256xf32>
    %c0_7 = arith.constant 0 : index
    %c1 = arith.constant 1 : index
    %c0_8 = arith.constant 0 : index
    %c0_9 = arith.constant 0 : index
    %5 = vector.load %arg2[%c0_7, %c1, %c0_8, %c0_9] : memref<1x4x1x256xf32, #tpu.memory_space<vmem>>, vector<1x1x1x256xf32>
    %6 = vector.shape_cast %5 : vector<1x1x1x256xf32> to vector<1x256xf32>
    %c0_10 = arith.constant 0 : index
    %c1_11 = arith.constant 1 : index
    %c0_12 = arith.constant 0 : index
    %c0_13 = arith.constant 0 : index
    %7 = vector.load %arg3[%c0_10, %c1_11, %c0_12, %c0_13] : memref<1x4x1x256xf32, #tpu.memory_space<vmem>>, vector<1x1x1x256xf32>
    %8 = vector.shape_cast %7 : vector<1x1x1x256xf32> to vector<1x256xf32>
    %9 = arith.maximumf %1, %6 : vector<1x256xf32>
    %10 = arith.subf %1, %9 : vector<1x256xf32>
    %11 = math.exp %10 : vector<1x256xf32>
    %12 = arith.mulf %2, %11 : vector<1x256xf32>
    %13 = arith.subf %6, %9 : vector<1x256xf32>
    %14 = math.exp %13 : vector<1x256xf32>
    %15 = arith.addf %12, %14 : vector<1x256xf32>
    %16 = arith.cmpf ogt, %8, %4 : vector<1x256xf32>
    %17 = arith.select %16, %8, %4 : vector<1x256xi1>, vector<1x256xf32>
    %18 = arith.select %16, %6, %1 : vector<1x256xi1>, vector<1x256xf32>
    %c0_14 = arith.constant 0 : index
    %c2 = arith.constant 2 : index
    %c0_15 = arith.constant 0 : index
    %c0_16 = arith.constant 0 : index
    %19 = vector.load %arg2[%c0_14, %c2, %c0_15, %c0_16] : memref<1x4x1x256xf32, #tpu.memory_space<vmem>>, vector<1x1x1x256xf32>
    %20 = vector.shape_cast %19 : vector<1x1x1x256xf32> to vector<1x256xf32>
    %c0_17 = arith.constant 0 : index
    %c2_18 = arith.constant 2 : index
    %c0_19 = arith.constant 0 : index
    %c0_20 = arith.constant 0 : index
    %21 = vector.load %arg3[%c0_17, %c2_18, %c0_19, %c0_20] : memref<1x4x1x256xf32, #tpu.memory_space<vmem>>, vector<1x1x1x256xf32>
    %22 = vector.shape_cast %21 : vector<1x1x1x256xf32> to vector<1x256xf32>
    %23 = arith.maximumf %9, %20 : vector<1x256xf32>
    %24 = arith.subf %9, %23 : vector<1x256xf32>
    %25 = math.exp %24 : vector<1x256xf32>
    %26 = arith.mulf %15, %25 : vector<1x256xf32>
    %27 = arith.subf %20, %23 : vector<1x256xf32>
    %28 = math.exp %27 : vector<1x256xf32>
    %29 = arith.addf %26, %28 : vector<1x256xf32>
    %30 = arith.cmpf ogt, %22, %17 : vector<1x256xf32>
    %31 = arith.select %30, %22, %17 : vector<1x256xi1>, vector<1x256xf32>
    %32 = arith.select %30, %20, %18 : vector<1x256xi1>, vector<1x256xf32>
    %c0_21 = arith.constant 0 : index
    %c3 = arith.constant 3 : index
    %c0_22 = arith.constant 0 : index
    %c0_23 = arith.constant 0 : index
    %33 = vector.load %arg2[%c0_21, %c3, %c0_22, %c0_23] : memref<1x4x1x256xf32, #tpu.memory_space<vmem>>, vector<1x1x1x256xf32>
    %34 = vector.shape_cast %33 : vector<1x1x1x256xf32> to vector<1x256xf32>
    %c0_24 = arith.constant 0 : index
    %c3_25 = arith.constant 3 : index
    %c0_26 = arith.constant 0 : index
    %c0_27 = arith.constant 0 : index
    %35 = vector.load %arg3[%c0_24, %c3_25, %c0_26, %c0_27] : memref<1x4x1x256xf32, #tpu.memory_space<vmem>>, vector<1x1x1x256xf32>
    %36 = vector.shape_cast %35 : vector<1x1x1x256xf32> to vector<1x256xf32>
    %37 = arith.maximumf %23, %34 : vector<1x256xf32>
    %38 = arith.subf %23, %37 : vector<1x256xf32>
    %39 = math.exp %38 : vector<1x256xf32>
    %40 = arith.mulf %29, %39 : vector<1x256xf32>
    %41 = arith.subf %34, %37 : vector<1x256xf32>
    %42 = math.exp %41 : vector<1x256xf32>
    %43 = arith.addf %40, %42 : vector<1x256xf32>
    %44 = arith.cmpf ogt, %36, %31 : vector<1x256xf32>
    %45 = arith.select %44, %34, %32 : vector<1x256xi1>, vector<1x256xf32>
    %46 = math.log %43 : vector<1x256xf32>
    %47 = arith.addf %37, %46 : vector<1x256xf32>
    %48 = arith.subf %47, %45 : vector<1x256xf32>
    %49 = vector.shape_cast %48 : vector<1x256xf32> to vector<1x1x256xf32>
    %cst_28 = arith.constant dense<0.000000e+00> : vector<1xf32>
    %50 = vector.multi_reduction <add>, %49, %cst_28 [1, 2] : vector<1x1x256xf32> to vector<1xf32>
    %51 = vector.shape_cast %50 : vector<1xf32> to vector<1x1x1xf32>
    %52 = vector.extract %51[0, 0, 0] : f32 from vector<1x1x1xf32>
    %53 = vector.broadcast %52 : f32 to vector<1x1xf32>
    %54 = vector.shape_cast %53 : vector<1x1xf32> to vector<1x1x1x1xf32>
    %c0_29 = arith.constant 0 : index
    %c0_30 = arith.constant 0 : index
    %c0_31 = arith.constant 0 : index
    %c0_32 = arith.constant 0 : index
    %55 = vector.load %arg4[%c0_29, %c0_30, %c0_31, %c0_32] : memref<1x1x1x1xf32, #tpu.memory_space<vmem>>, vector<1x1x1x1xf32>
    tpu.vector_store %arg4[%c0_29, %c0_30, %c0_31, %c0_32], %54 {strides = array<i32>} : memref<1x1x1x1xf32, #tpu.memory_space<vmem>>, vector<1x1x1x1xf32>,
    return
  }
  func.func @transform_0(%arg0: i32, %arg1: i32) -> (i32, i32, i32, i32) {
    %c0_i32 = arith.constant 0 : i32
    %c0_i32_0 = arith.constant 0 : i32
    %c0_i32_1 = arith.constant 0 : i32
    return %arg0, %c0_i32, %arg1, %c0_i32_0 : i32, i32, i32, i32
  }
  func.func @transform_1(%arg0: i32, %arg1: i32) -> (i32, i32, i32, i32) {
    %c0_i32 = arith.constant 0 : i32
    %c0_i32_0 = arith.constant 0 : i32
    %c0_i32_1 = arith.constant 0 : i32
    return %arg0, %c0_i32, %arg1, %c0_i32_0 : i32, i32, i32, i32
  }
  func.func @transform_2(%arg0: i32, %arg1: i32) -> (i32, i32, i32, i32) {
    %c0_i32 = arith.constant 0 : i32
    %c0_i32_0 = arith.constant 0 : i32
    %c0_i32_1 = arith.constant 0 : i32
    return %arg0, %arg1, %c0_i32, %c0_i32_0 : i32, i32, i32, i32
  }
}

</mosaic_0001>

<llo_original>
// kernel: tpu_custom_call.1
$region0: #{tpu_custom_call.1}
  #allocation0 [shape = 'u32[]', space=smem, size = 0x4, offset = 0x4, fixed_abs, tag = 'smem constant byte address 0x4 - core index']
  #allocation1 [shape = 'u32[144,128]{1,0:T(1,128)}', space=vmem, size = 0x12000, scoped, tag = 'internal scratch']
  %s0 = inlined_call_operand.hbm [shape: f32[2,4,1,256], index: 0, kind: input, shape index: {}]
  %s1 = inlined_call_operand.hbm [shape: f32[2,4,1,256], index: 1, kind: input, shape index: {}]
  %s2 = inlined_call_operand.vmem [shape: f32[2,1,1,1], index: 2, kind: output, shape index: {}]
  %s3 = sld [smem:[#allocation0]]
  $region49: #{tpu_custom_call.1} parent=0
    _
  %s5 = ssub.s32 1, %s3
  %s6 = scalar_select 0, %s5, %s3
  $region1: #{tpu_custom_call.1} parent=0
    #allocation2 [shape = 'u8[8192]{0}', space=vmem, size = 0x2000, scoped, tag = 'input window, operand 0']
    #allocation3 [shape = 's32[2]{0}', space=sflag, size = 0x8, scoped, tag = 'scoped memory for tpu_custom_call.1']
    #allocation4 [shape = 'u8[8192]{0}', space=vmem, size = 0x2000, scoped, tag = 'input window, operand 1']
    #allocation5 [shape = 's32[2]{0}', space=sflag, size = 0x8, scoped, tag = 'scoped memory for tpu_custom_call.1']
    %7 = vsyncpa [#allocation3], 0
    %s8 = scalar_lea.sflag [#allocation3], 1
    %9 = vsyncpa %s8, 0
    %10 = vsyncpa [#allocation5], 0
    %s11 = scalar_lea.sflag [#allocation5], 1
    %12 = vsyncpa %s11, 0
    loop: start=0, step=1, limit=4
    $region2: #{tpu_custom_call.1} parent=1 // loop_pre_header
      _
    $region3: #{tpu_custom_call.1} parent=1 // loop_header
      %s14 = sphi 0, %s18
      %p15 = scmp.ge.s32.totalorder %s14, 4
      %s21 = sphi 0, %s33
      %s22 = sphi 0, %s29
      %s23 = sphi 0, %s21
      %s24 = sphi 0, %s22
      %s25 = sphi 0, %s23
      %s26 = sphi 0, %s24
      %s38 = sphi 0, %s40
      %s41 = sphi 0, %s38
      %s42 = sphi 0, %s41
      %s58 = sphi 0, %s42
      %s66 = sphi 0, %s68
      %s69 = sphi 0, %s66
      %s70 = sphi 0, %s69
      %s86 = sphi 0, %s70
      %s94 = sphi 0, %s96
      %s97 = sphi 0, %s94
      %s98 = sphi 0, %s97
      %s114 = sphi 0, %s98
    $region4: #{tpu_custom_call.1} parent=1 // loop_header_branch
      %17 = sbr.rel (%p15) target = $region8
    $region5: #{tpu_custom_call.1} parent=1 // loop_body
      %s19 = ssub.s32 %s14, 1
      %s20 = ssub.s32 %s14, 2
      %s27 = sadd.s32 1, %s22
      %p28 = scmp.ge.s32.totalorder %s27, 1
      %s29 = scalar_select %p28, 0, %s27
      %s30 = sadd.s32 1, %s21
      %s31 = scalar_select %p28, %s30, %s21
      %p32 = scmp.ge.s32.totalorder %s31, 2
      %s33 = scalar_select %p32, 0, %s31
      %s34 = ssub.s32 %s21, %s33
      %s35 = ssub.s32 %s22, %s29
      %s36 = sor.u32 %s34, %s35
      %p37 = scmp.eq.s32.totalorder %s36, 0
      %s39 = sadd.s32 %s38, 1
      %s40 = scalar_select %p37, %s38, %s39
      %p43 = pneg %p37
      %p44 = scmp.eq.s32.totalorder %s14, 1
      %p45 = por %p43, %p44
      %p46 = scmp.ne.s32.totalorder %s38, %s41
      %p47 = scmp.eq.s32.totalorder %s14, 0
      %p48 = por %p46, %p47
      %p49 = scmp.ne.s32.totalorder %s38, %s41
      %p50 = scmp.eq.s32.totalorder %s19, 1
      %p51 = por %p49, %p50
      %p52 = scmp.ne.s32.totalorder %s41, %s42
      %p53 = scmp.eq.s32.totalorder %s19, 0
      %p54 = por %p52, %p53
      %p55 = scmp.ne.s32.totalorder %s41, %s42
      %p56 = scmp.eq.s32.totalorder %s20, 1
      %p57 = por %p55, %p56
      %p59 = scmp.ne.s32.totalorder %s42, %s58
      %p60 = scmp.eq.s32.totalorder %s20, 0
      %p61 = por %p59, %p60
      %s62 = ssub.s32 %s21, %s33
      %s63 = ssub.s32 %s22, %s29
      %s64 = sor.u32 %s62, %s63
      %p65 = scmp.eq.s32.totalorder %s64, 0
      %s67 = sadd.s32 %s66, 1
      %s68 = scalar_select %p65, %s66, %s67
      %p71 = pneg %p65
      %p72 = scmp.eq.s32.totalorder %s14, 1
      %p73 = por %p71, %p72
      %p74 = scmp.ne.s32.totalorder %s66, %s69
      %p75 = scmp.eq.s32.totalorder %s14, 0
      %p76 = por %p74, %p75
      %p77 = scmp.ne.s32.totalorder %s66, %s69
      %p78 = scmp.eq.s32.totalorder %s19, 1
      %p79 = por %p77, %p78
      %p80 = scmp.ne.s32.totalorder %s69, %s70
      %p81 = scmp.eq.s32.totalorder %s19, 0
      %p82 = por %p80, %p81
      %p83 = scmp.ne.s32.totalorder %s69, %s70
      %p84 = scmp.eq.s32.totalorder %s20, 1
      %p85 = por %p83, %p84
      %p87 = scmp.ne.s32.totalorder %s70, %s86
      %p88 = scmp.eq.s32.totalorder %s20, 0
      %p89 = por %p87, %p88
      %s90 = ssub.s32 %s21, %s33
      %s91 = ssub.s32 %s22, %s29
      %s92 = sor.u32 %s90, %s91
      %p93 = scmp.eq.s32.totalorder %s92, 0
      %s95 = sadd.s32 %s94, 1
      %s96 = scalar_select %p93, %s94, %s95
      %p99 = pneg %p93
      %p100 = scmp.eq.s32.totalorder %s14, 1
      %p101 = por %p99, %p100
      %p102 = scmp.ne.s32.totalorder %s94, %s97
      %p103 = scmp.eq.s32.totalorder %s14, 0
      %p104 = por %p102, %p103
      %p105 = scmp.ne.s32.totalorder %s94, %s97
      %p106 = scmp.eq.s32.totalorder %s19, 1
      %p107 = por %p105, %p106
      %p108 = scmp.ne.s32.totalorder %s97, %s98
      %p109 = scmp.eq.s32.totalorder %s19, 0
      %p110 = por %p108, %p109
      %p111 = scmp.ne.s32.totalorder %s97, %s98
      %p112 = scmp.eq.s32.totalorder %s20, 1
      %p113 = por %p111, %p112
      %p115 = scmp.ne.s32.totalorder %s98, %s114
      %p116 = scmp.eq.s32.totalorder %s20, 0
      %p117 = por %p115, %p116
      %p118 = scmp.le.s32.totalorder 1, %s14
      %p119 = scmp.lt.s32.totalorder %s14, 3
      %p120 = pnand %p118, %p119
      %p121 = pneg %p120
      // Predicated region
      $region9: #{tpu_custom_call.1} parent=5 // pred_check
        _
      $region10: #{tpu_custom_call.1} parent=5 // pred_check_branch
        %123 = sbr.rel (%p120) target = $region12
      $region11: #{tpu_custom_call.1} parent=5 // pred_region
        %s124 = ssub.s32 %s14, 1
      $region12: #{tpu_custom_call.1} parent=5 // pred_fallthru
        _
      %p125 = scmp.lt.s32.totalorder %s14, 2
      // Predicated region
      $region13: #{tpu_custom_call.1} parent=5 // pred_check
        %p126 = pneg %p125
      $region14: #{tpu_custom_call.1} parent=5 // pred_check_branch
        %128 = sbr.rel (%p126) target = $region16
      $region15: #{tpu_custom_call.1} parent=5 // pred_region
        // Predicated region
        $region17: #{tpu_custom_call.1} parent=15 // pred_check
          %p129 = pneg %p48
        $region18: #{tpu_custom_call.1} parent=15 // pred_check_branch
          %131 = sbr.rel (%p129) target = $region20
        $region19: #{tpu_custom_call.1} parent=15 // pred_region
          %s132 = sand.u32 %s38, 1
          %s133 = scalar_lea.sflag [#allocation3], %s132
          %s134 = sand.u32 %s38, 1
          %s135 = smul.addr %s134, 8
          %s136 = scalar_lea.vmem [#allocation2], %s135
          %s138 = ssub.s32 128, 128
          %139 = vsyncadd %s133, %s138
          %s140 = smul.addr %s22, 2
          %s141 = smul.addr %s21, 8
          %s142 = sadd.s32 %s140, %s141
          %s143 = smul.addr %s142, 16
          %s144 = scalar_lea.hbm %s0, %s143
          %s145 = sshll.u32 %s136, 4
          %s146 = int_to_ptr.vmem [resolvable:$true] %s145
          %151 = dma.hbm_to_vmem [thread:$0]  %s144, 128, %s146, %s133, 32, 32, 2
        $region20: #{tpu_custom_call.1} parent=15 // pred_fallthru
          _
        // Predicated region
        $region21: #{tpu_custom_call.1} parent=15 // pred_check
          %p152 = pneg %p76
        $region22: #{tpu_custom_call.1} parent=15 // pred_check_branch
          %154 = sbr.rel (%p152) target = $region24
        $region23: #{tpu_custom_call.1} parent=15 // pred_region
          %s155 = sand.u32 %s66, 1
          %s156 = scalar_lea.sflag [#allocation5], %s155
          %s157 = sand.u32 %s66, 1
          %s158 = smul.addr %s157, 8
          %s159 = scalar_lea.vmem [#allocation4], %s158
          %s161 = ssub.s32 128, 128
          %162 = vsyncadd %s156, %s161
          %s163 = smul.addr %s22, 2
          %s164 = smul.addr %s21, 8
          %s165 = sadd.s32 %s163, %s164
          %s166 = smul.addr %s165, 16
          %s167 = scalar_lea.hbm %s1, %s166
          %s168 = sshll.u32 %s159, 4
          %s169 = int_to_ptr.vmem [resolvable:$true] %s168
          %174 = dma.hbm_to_vmem [thread:$0]  %s167, 128, %s169, %s156, 32, 32, 2
        $region24: #{tpu_custom_call.1} parent=15 // pred_fallthru
          _
      $region16: #{tpu_custom_call.1} parent=5 // pred_fallthru
        _
      %p175 = scmp.le.s32.totalorder 1, %s14
      %p176 = scmp.lt.s32.totalorder %s14, 3
      %p177 = pnand %p175, %p176
      %p178 = pneg %p177
      // Predicated region
      $region25: #{tpu_custom_call.1} parent=5 // pred_check
        _
      $region26: #{tpu_custom_call.1} parent=5 // pred_check_branch
        %180 = sbr.rel (%p177) target = $region28
      $region27: #{tpu_custom_call.1} parent=5 // pred_region
        %s181 = ssub.s32 %s14, 1
        %s182 = sand.u32 %s41, 1
        %s183 = scalar_lea.sflag [#allocation3], %s182
        %s184 = sand.u32 %s41, 1
        %s185 = smul.addr %s184, 8
        %s186 = scalar_lea.vmem [#allocation2], %s185
        // Predicated region
        $region29: #{tpu_custom_call.1} parent=27 // pred_check
          %p187 = pneg %p54
        $region30: #{tpu_custom_call.1} parent=27 // pred_check_branch
          %189 = sbr.rel (%p187) target = $region32
        $region31: #{tpu_custom_call.1} parent=27 // pred_region
          %190 = dma.done %s183, 128
        $region32: #{tpu_custom_call.1} parent=27 // pred_fallthru
          _
        %s191 = sand.u32 %s69, 1
        %s192 = scalar_lea.sflag [#allocation5], %s191
        %s193 = sand.u32 %s69, 1
        %s194 = smul.addr %s193, 8
        %s195 = scalar_lea.vmem [#allocation4], %s194
        // Predicated region
        $region33: #{tpu_custom_call.1} parent=27 // pred_check
          %p196 = pneg %p82
        $region34: #{tpu_custom_call.1} parent=27 // pred_check_branch
          %198 = sbr.rel (%p196) target = $region36
        $region35: #{tpu_custom_call.1} parent=27 // pred_region
          %199 = dma.done %s192, 128
        $region36: #{tpu_custom_call.1} parent=27 // pred_fallthru
          _
        %s200 = sand.u32 %s41, 1
        %s201 = scalar_lea.sflag [#allocation3], %s200
        %s202 = sand.u32 %s41, 1
        %s203 = smul.addr %s202, 8
        %s204 = scalar_lea.vmem [#allocation2], %s203
        %p205 = pneg %p54
        %p206 = pneg %p51
        %s207 = sand.u32 %s69, 1
        %s208 = scalar_lea.sflag [#allocation5], %s207
        %s209 = sand.u32 %s69, 1
        %s210 = smul.addr %s209, 8
        %s211 = scalar_lea.vmem [#allocation4], %s210
        %p212 = pneg %p82
        %p213 = pneg %p79
        %p214 = pneg %p110
        %p215 = pneg %p107
        %p216 = scmp.lt.s32.totalorder %s23, 1
        %s217 = scalar_select %p216, %s23, 1
        %p218 = scmp.lt.s32.totalorder %s24, 0
        %s219 = scalar_select %p218, %s24, 0
        %s220 = sadd.s32 %s219, %s217
        %s221 = scalar_lea.vmem %s2, %s220
        %p222 = scmp.lt.s32.totalorder %s23, 1
        %s223 = scalar_select %p222, %s23, 1
        %p224 = scmp.lt.s32.totalorder %s24, 0
        %s225 = scalar_select %p224, %s24, 0
        %s226 = sadd.s32 %s225, %s223
        %s227 = scalar_lea.vmem %s2, %s226
        %v228 = vld [vmem:[%s186] sm:$0x3]
        %v229 = vld [vmem:[%s195] sm:$0x3]
        %s230 = scalar_lea.vmem %s186, 2 [#allocation2]
        %v231 = vld [vmem:[%s230] sm:$0x3]
        %s232 = scalar_lea.vmem %s195, 2 [#allocation4]
        %v233 = vld [vmem:[%s232] sm:$0x3]
        %v234 = vmax.f32 %v228, %v231
        %v235 = vsub.f32 %v228, %v234
        %v236 = vmul.f32 %v235, 1.442695
        %v237 = vpow.pop %v236
        %v238 = vsub.f32 %v231, %v234
        %v239 = vmul.f32 %v238, 1.442695
        %v240 = vpow.pop %v239
        %v241 = vadd.f32 %v237, %v240
        %vm242 = vcmp.gt.f32.partialorder %v233, %v229
        %v243 = vsel %vm242, %v233, %v229
        %v244 = vsel %vm242, %v231, %v228
        %s245 = scalar_lea.vmem %s186, 4 [#allocation2]
        %v246 = vld [vmem:[%s245] sm:$0x3]
        %s247 = scalar_lea.vmem %s195, 4 [#allocation4]
        %v248 = vld [vmem:[%s247] sm:$0x3]
        %v249 = vmax.f32 %v234, %v246
        %v250 = vsub.f32 %v234, %v249
        %v251 = vmul.f32 %v250, 1.442695
        %v252 = vpow.pop %v251
        %v253 = vmul.f32 %v241, %v252
        %v254 = vsub.f32 %v246, %v249
        %v255 = vmul.f32 %v254, 1.442695
        %v256 = vpow.pop %v255
        %v257 = vadd.f32 %v253, %v256
        %vm258 = vcmp.gt.f32.partialorder %v248, %v243
        %v259 = vsel %vm258, %v248, %v243
        %v260 = vsel %vm258, %v246, %v244
        %s261 = scalar_lea.vmem %s186, 6 [#allocation2]
        %v262 = vld [vmem:[%s261] sm:$0x3]
        %s263 = scalar_lea.vmem %s195, 6 [#allocation4]
        %v264 = vld [vmem:[%s263] sm:$0x3]
        %v265 = vmax.f32 %v249, %v262
        %v266 = vsub.f32 %v249, %v265
        %v267 = vmul.f32 %v266, 1.442695
        %v268 = vpow.pop %v267
        %v269 = vmul.f32 %v257, %v268
        %v270 = vsub.f32 %v262, %v265
        %v271 = vmul.f32 %v270, 1.442695
        %v272 = vpow.pop %v271
        %v273 = vadd.f32 %v269, %v272
        %vm274 = vcmp.gt.f32.partialorder %v264, %v259
        %v275 = vsel %vm274, %v262, %v260
        %v276 = vlog2.pop %v273
        %v277 = vmul.f32 %v276, 0.6931472
        %v278 = vadd.f32 %v265, %v277
        %v279 = vsub.f32 %v278, %v275
        %v281 = vlaneseq
        %v282 = vshrl.u32 %v281, 7
        %v283 = vsub.s32 0, %v282
        %v284 = vrot.slane %v279, %v283
        %v285 = vlaneseq
        %v286 = vshrl.u32 %v285, 7
        %v287 = vsub.s32 1, %v286
        %v288 = vrot.slane %v279, %v287
        %vm291 = vcmask 1040384
        %v292 = vsel %vm291, %v284, 0.0
        %v293 = vsel %vm291, %v288, 0.0
        %v294 = vadd.f32 %v292, %v293
        %295 = vadd.xlane.f32.xlu0 %v294
        %v296 = vpop.xlane.xlu0 %295
        %v297 = vrot.slane %v296, 4
        %v298 = vadd.f32 %v296, %v297
        %v299 = vrot.slane %v298, 2
        %v300 = vadd.f32 %v298, %v299
        %v301 = vrot.slane %v300, 1
        %v302 = vadd.f32 %v300, %v301
        %s303 = vtos %v302
        %v304 = vstv %s303
        %vm305 = vcmask 0
        %306 = vst.msk [vmem:[%s227] sm:$0x1] %vm305, %v304
        %p307 = scmp.lt.s32.totalorder %s23, 1
        %s308 = scalar_select %p307, %s23, 1
        %p309 = scmp.lt.s32.totalorder %s24, 0
        %s310 = scalar_select %p309, %s24, 0
        %s311 = sadd.s32 %s310, %s308
        %s312 = scalar_lea.vmem %s2, %s311
        // Predicated region
        $region37: #{tpu_custom_call.1} parent=27 // pred_check
          %p313 = pneg %p107
        $region38: #{tpu_custom_call.1} parent=27 // pred_check_branch
          %315 = sbr.rel (%p313) target = $region40
        $region39: #{tpu_custom_call.1} parent=27 // pred_region
          _
        $region40: #{tpu_custom_call.1} parent=27 // pred_fallthru
          _
      $region28: #{tpu_custom_call.1} parent=5 // pred_fallthru
        _
      %p316 = scmp.le.s32.totalorder 2, %s14
      // Predicated region
      $region41: #{tpu_custom_call.1} parent=5 // pred_check
        %p317 = pneg %p316
      $region42: #{tpu_custom_call.1} parent=5 // pred_check_branch
        %319 = sbr.rel (%p317) target = $region44
      $region43: #{tpu_custom_call.1} parent=5 // pred_region
        %s320 = ssub.s32 %s14, 2
        // Predicated region
        $region45: #{tpu_custom_call.1} parent=43 // pred_check
          %p321 = pneg %p113
        $region46: #{tpu_custom_call.1} parent=43 // pred_check_branch
          %323 = sbr.rel (%p321) target = $region48
        $region47: #{tpu_custom_call.1} parent=43 // pred_region
          %p324 = scmp.lt.s32.totalorder %s25, 1
          %s325 = scalar_select %p324, %s25, 1
          %p326 = scmp.lt.s32.totalorder %s26, 0
          %s327 = scalar_select %p326, %s26, 0
          %s328 = sadd.s32 %s327, %s325
          %s329 = scalar_lea.vmem %s2, %s328
        $region48: #{tpu_custom_call.1} parent=43 // pred_fallthru
          _
      $region44: #{tpu_custom_call.1} parent=5 // pred_fallthru
        _
    $region6: #{tpu_custom_call.1} parent=1 // loop_footer
      %s18 = sadd.s32 1, %s14
    $region7: #{tpu_custom_call.1} parent=1 // loop_footer_branch
      %13 = sbr.rel target = $region3
    $region8: #{tpu_custom_call.1} parent=1 // loop_exit
      _
    %330 = vsyncpa [#allocation3], 1
    %s331 = scalar_lea.sflag [#allocation3], 1
    %332 = vsyncpa %s331, 1
    %333 = vsyncpa [#allocation5], 1
    %s334 = scalar_lea.sflag [#allocation5], 1
    %335 = vsyncpa %s334, 1

</llo_original>
